<compile_context>
chip_gen: v5e
topology: v5e:2x2
jax: 0.10.0
libtpu: 0.0.40
codegen_flags: <defaults>
</compile_context>

<pallas_src>
import functools

import jax
import jax.numpy as jnp
from jax.experimental import pallas as pl
from jax.experimental.pallas import tpu as pltpu


def _round_up(x, m):
    return ((x + m - 1) // m) * m


def _sine_activation_kernel(tau_ref, w_ref, b_ref, o_ref, *, out_features):
    # Single MXU matmul over the packed (block-diagonal) weight, f32 accumulation.
    z = jnp.dot(tau_ref[...], w_ref[...], preferred_element_type=jnp.float32)
    z = z + b_ref[...]                              # (tb, gn) + (1, gn)
    gn = z.shape[-1]
    # Mask built over a single (1, gn) row (hoisted off the per-vreg path);
    # jnp.where broadcasts it across the batch-tile rows.  sin -> EUP slot.
    col = jax.lax.broadcasted_iota(jnp.int32, (1, gn), 1)
    periodic = (col % out_features) < (out_features - 1)
    o_ref[...] = jnp.where(periodic, jnp.sin(z), z).astype(o_ref.dtype)


def pack_time2vec_params(w, b, w0, b0):
    """Pack parameters ONCE, outside the per-call hot path.

    Builds W_all = [w | w0] (in, out) and b_all = [b | b0] (out,), then -- when
    out_features divides 128 -- expands them into a G-block-diagonal weight
    (G*in, 128) and tiled bias (1, 128) so the kernel output is lane-dense
    (unmasked vst, full 128-lane rows).
    Returns (w_big, b_big, in_features, out_features, G).
    """
    in_features = w.shape[0]
    out_features = w.shape[1] + 1
    w_all = jnp.concatenate([w, w0], axis=-1).astype(jnp.float32)   # (in, out)
    b_all = jnp.concatenate([b, b0], axis=-1).astype(jnp.float32)   # (out,)
    if out_features < 128 and 128 % out_features == 0:
        g = 128 // out_features
    else:
        g = 1
    # Block-diagonal expansion: kron(I_G, W_all) -> (G*in, G*out).
    w_big = jnp.kron(jnp.eye(g, dtype=jnp.float32), w_all)
    b_big = jnp.tile(b_all, g)[None, :]                              # (1, G*out)
    return w_big, b_big, in_features, out_features, g


def sine_activation(tau, w_big, b_big, in_features, out_features, g,
                    *, packed_rows_per_step=2048, out_dtype=jnp.float32):
    """Pallas implementation of SineActivation.forward.

    tau   : (B, in_features) float32
    w_big : (g*in_features, g*out_features)  -- from pack_time2vec_params
    b_big : (1, g*out_features)
    returns (B, out_features) in out_dtype (float32 by default).
    """
    B = tau.shape[0]
    assert tau.shape[1] == in_features
    gk = g * in_features      # packed contraction dim
    gn = g * out_features     # packed output lanes (128 when g > 1)

    tau = tau.astype(jnp.float32)

    # Pad only to a multiple of g (<= g-1 extra rows), NOT to a multiple of the
    # batch tile -- the ragged last grid block is handled by Pallas masking.
    b_packed = pl.cdiv(B, g)
    b_pad = b_packed * g
    if b_pad != B:
        tau = jnp.pad(tau, ((0, b_pad - B), (0, 0)))  # zero rows, sliced off later
    tau_packed = tau.reshape(b_packed, gk)            # free row-major refold

    # Batch tile: big enough to amortize the ~0.35 us per-step overhead, but
    # clamped so v7x's "parallel" grid axis keeps >= 4 steps when B allows
    # (otherwise the second TensorCore idles).  Multiple of 8 sublanes.
    tb = min(packed_rows_per_step, max(8, _round_up(pl.cdiv(b_packed, 4), 8)))
    if tb >= b_packed:
        tb = b_packed            # single full-extent block (always layout-legal)
    grid = (pl.cdiv(b_packed, tb),)

    # Advisory cost of what actually executes (block-diagonal matmul, sin on
    # every lane), so XLA schedules surrounding ops sensibly.
    cost = pl.CostEstimate(
        flops=2 * b_packed * gk * gn,
        transcendentals=b_packed * gn,
        bytes_accessed=4 * (b_packed * gk + gk * gn + gn) +
                       jnp.dtype(out_dtype).itemsize * b_packed * gn,
    )

    kernel = functools.partial(_sine_activation_kernel, out_features=out_features)

    out_packed = pl.pallas_call(
        kernel,
        out_shape=jax.ShapeDtypeStruct((b_packed, gn), out_dtype),
        grid_spec=pltpu.PrefetchScalarGridSpec(
            num_scalar_prefetch=0,
            grid=grid,
            in_specs=[
                pl.BlockSpec((tb, gk), lambda i: (i, 0)),   # tau tile, pipelined
                pl.BlockSpec((gk, gn), lambda i: (0, 0)),   # weights stay resident
                pl.BlockSpec((1, gn), lambda i: (0, 0)),    # bias stays resident
            ],
            out_specs=pl.BlockSpec((tb, gn), lambda i: (i, 0)),
        ),
        compiler_params=pltpu.CompilerParams(
            dimension_semantics=("parallel",),       # independent batch tiles (v7x 2-TC)
            vmem_limit_bytes=32 * 1024 * 1024,        # explicit, safe on v5e/v6e/v7x
        ),
        cost_estimate=cost,
    )(tau_packed, w_big, b_big)

    # Free row-major unpack back to (B, out_features), drop padding rows.
    out = out_packed.reshape(b_pad, out_features)
    return out[:B]


if __name__ == "__main__":
    # Small deterministic problem: batch=16, in_features=8, out_features=32.
    B, in_features, out_features = 16, 8, 32

    key = jax.random.PRNGKey(0)
    k_tau, k_w0, k_b0, k_w, k_b = jax.random.split(key, 5)

    tau = jax.random.normal(k_tau, (B, in_features), dtype=jnp.float32)
    # Parameters (same shapes as the nn.Module __init__, torch.randn-style init).
    w0 = jax.random.normal(k_w0, (in_features, 1), dtype=jnp.float32)
    b0 = jax.random.normal(k_b0, (1,), dtype=jnp.float32)
    w = jax.random.normal(k_w, (in_features, out_features - 1), dtype=jnp.float32)
    b = jax.random.normal(k_b, (out_features - 1,), dtype=jnp.float32)

    # Pack parameters once (outside the per-call hot path).
    w_big, b_big, in_f, out_f, g = pack_time2vec_params(w, b, w0, b0)

    out = sine_activation(tau, w_big, b_big, in_f, out_f, g)
    out = jax.block_until_ready(out)

    # Reference check in plain JAX (mirrors t2v).
    v1 = jnp.sin(tau @ w + b)
    v2 = tau @ w0 + b0
    ref = jnp.concatenate([v1, v2], axis=-1)
    assert out.shape == (B, out_features), out.shape
    assert jnp.allclose(out, ref, atol=1e-5, rtol=1e-5), float(
        jnp.max(jnp.abs(out - ref))
    )

    print("KERNEL_OK")
</pallas_src>

<mosaic_0001>
module attributes {stable_mosaic.version = 11 : i64} {
  func.func @_sine_activation_kernel(%arg0: i32, %arg1: memref<4x32xf32, #tpu.memory_space<vmem>>, %arg2: memref<32x128xf32, #tpu.memory_space<vmem>>, %arg3: memref<1x128xf32, #tpu.memory_space<vmem>>, %arg4: memref<4x128xf32, #tpu.memory_space<vmem>>) attributes {dimension_semantics = [#tpu.dimension_semantics<parallel>], iteration_bounds = array<i64: 1>, scalar_prefetch = 0 : i64, scratch_operands = 0 : i64, tpu.core_type = #tpu.core_type<tc>, window_params = [{transform_indices = @transform_0, window_bounds = array<i64: 4, 32>}, {pipeline_mode = #tpu.pipeline_mode<synchronous>, transform_indices = @transform_1, window_bounds = array<i64: 32, 128>}, {pipeline_mode = #tpu.pipeline_mode<synchronous>, transform_indices = @transform_2, window_bounds = array<i64: 1, 128>}, {transform_indices = @transform_3, window_bounds = array<i64: 4, 128>}]} {
    %c0 = arith.constant 0 : index
    %c0_0 = arith.constant 0 : index
    %0 = vector.load %arg1[%c0, %c0_0] : memref<4x32xf32, #tpu.memory_space<vmem>>, vector<4x32xf32>
    %c0_1 = arith.constant 0 : index
    %c0_2 = arith.constant 0 : index
    %1 = vector.load %arg2[%c0_1, %c0_2] : memref<32x128xf32, #tpu.memory_space<vmem>>, vector<32x128xf32>
    %cst = arith.constant dense<0.000000e+00> : vector<4x128xf32>
    %2 = tpu.matmul %0, %1, %cst {dimension_numbers = #tpu.dot_dimension_numbers<[1], [0], [0], [1], [0, 0, 1, 1], [], []>} : vector<4x32xf32>, vector<32x128xf32>, vector<4x128xf32> -> vector<4x128xf32>
    %c0_3 = arith.constant 0 : index
    %c0_4 = arith.constant 0 : index
    %3 = vector.load %arg3[%c0_3, %c0_4] : memref<1x128xf32, #tpu.memory_space<vmem>>, vector<1x128xf32>
    %4 = vector.broadcast %3 : vector<1x128xf32> to vector<4x128xf32>
    %5 = arith.addf %2, %4 : vector<4x128xf32>
    %6 = tpu.iota {dimensions = array<i32: 1>} : vector<1x128xi32>
    %c32_i32 = arith.constant 32 : i32
    %c0_i32 = arith.constant 0 : i32
    %7 = arith.cmpi eq, %c32_i32, %c0_i32 : i32
    %c1_i32 = arith.constant 1 : i32
    %8 = arith.select %7, %c1_i32, %c32_i32 : i32
    %9 = vector.broadcast %8 : i32 to vector<1x128xi32>
    %10 = arith.remsi %6, %9 : vector<1x128xi32>
    %c0_i32_5 = arith.constant 0 : i32
    %11 = vector.broadcast %c0_i32_5 : i32 to vector<1x128xi32>
    %12 = arith.cmpi ne, %10, %11 : vector<1x128xi32>
    %c0_i32_6 = arith.constant 0 : i32
    %13 = vector.broadcast %c0_i32_6 : i32 to vector<1x128xi32>
    %14 = arith.cmpi slt, %10, %13 : vector<1x128xi32>
    %c0_i32_7 = arith.constant 0 : i32
    %15 = arith.cmpi slt, %8, %c0_i32_7 : i32
    %16 = vector.broadcast %15 : i1 to vector<1x128xi1>
    %17 = vector.broadcast %16 : vector<1x128xi1> to vector<1x128xi1>
    %18 = arith.xori %14, %17 : vector<1x128xi1>
    %19 = arith.andi %18, %12 : vector<1x128xi1>
    %20 = vector.broadcast %8 : i32 to vector<1x128xi32>
    %21 = arith.addi %10, %20 : vector<1x128xi32>
    %22 = arith.select %19, %21, %10 : vector<1x128xi1>, vector<1x128xi32>
    %c31_i32 = arith.constant 31 : i32
    %23 = vector.broadcast %c31_i32 : i32 to vector<1x128xi32>
    %24 = arith.cmpi slt, %22, %23 : vector<1x128xi32>
    %25 = math.sin %5 : vector<4x128xf32>
    %26 = vector.shape_cast %24 : vector<1x128xi1> to vector<1x128xi1>
    %27 = vector.broadcast %26 : vector<1x128xi1> to vector<4x128xi1>
    %28 = arith.select %27, %25, %5 : vector<4x128xi1>, vector<4x128xf32>
    %c0_8 = arith.constant 0 : index
    %c0_9 = arith.constant 0 : index
    %29 = vector.load %arg4[%c0_8, %c0_9] : memref<4x128xf32, #tpu.memory_space<vmem>>, vector<4x128xf32>
    tpu.vector_store %arg4[%c0_8, %c0_9], %28 {strides = array<i32>} : memref<4x128xf32, #tpu.memory_space<vmem>>, vector<4x128xf32>,
    return
  }
  func.func @transform_0(%arg0: i32) -> (i32, i32) {
    %c0_i32 = arith.constant 0 : i32
    %c0_i32_0 = arith.constant 0 : i32
    return %arg0, %c0_i32 : i32, i32
  }
  func.func @transform_1(%arg0: i32) -> (i32, i32) {
    %c0_i32 = arith.constant 0 : i32
    %c0_i32_0 = arith.constant 0 : i32
    %c0_i32_1 = arith.constant 0 : i32
    return %c0_i32, %c0_i32_0 : i32, i32
  }
  func.func @transform_2(%arg0: i32) -> (i32, i32) {
    %c0_i32 = arith.constant 0 : i32
    %c0_i32_0 = arith.constant 0 : i32
    %c0_i32_1 = arith.constant 0 : i32
    return %c0_i32, %c0_i32_0 : i32, i32
  }
  func.func @transform_3(%arg0: i32) -> (i32, i32) {
    %c0_i32 = arith.constant 0 : i32
    %c0_i32_0 = arith.constant 0 : i32
    return %arg0, %c0_i32 : i32, i32
  }
}

</mosaic_0001>

<llo_original>
// kernel: tpu_custom_call.1
$region0: #{tpu_custom_call.1}
  #allocation0 [shape = 'u32[]', space=smem, size = 0x4, offset = 0x4, fixed_abs, tag = 'smem constant byte address 0x4 - core index']
  #allocation1 [shape = 'u32[72,128]{1,0:T(1,128)}', space=vmem, size = 0x9000, scoped, tag = 'internal scratch']
  %s0 = inlined_call_operand.hbm [shape: f32[4,32], index: 0, kind: input, shape index: {}]
  %s1 = inlined_call_operand.hbm [shape: f32[32,128], index: 1, kind: input, shape index: {}]
  %s2 = inlined_call_operand.vmem [shape: f32[1,128], index: 2, kind: input, shape index: {}]
  %s3 = inlined_call_operand.hbm [shape: f32[4,128], index: 3, kind: output, shape index: {}]
  %s4 = sld [smem:[#allocation0]]
  $region30: #{tpu_custom_call.1} parent=0
    _
  %s6 = ssub.s32 1, %s4
  %s7 = scalar_select 0, %s6, %s4
  $region1: #{tpu_custom_call.1} parent=0
    #allocation2 [shape = 'u8[2048]{0}', space=vmem, size = 0x800, scoped, tag = 'input window, operand 0, single buffered']
    #allocation3 [shape = 's32[1]{0}', space=sflag, size = 0x4, scoped, tag = 'scoped memory for tpu_custom_call.1']
    #allocation4 [shape = 's32[1]{0}', space=sflag, size = 0x4, scoped, tag = 'scoped memory for tpu_custom_call.1']
    #allocation5 [shape = 'u8[16384]{0}', space=vmem, size = 0x4000, scoped, tag = 'input window, operand 1, single buffered']
    #allocation6 [shape = 's32[1]{0}', space=sflag, size = 0x4, scoped, tag = 'scoped memory for tpu_custom_call.1']
    #allocation7 [shape = 'u8[2048]{0}', space=vmem, size = 0x800, scoped, tag = 'output window, operand 0, single buffered']
    %8 = vsyncpa [#allocation3], 0
    %9 = vsyncpa [#allocation6], 0
    %10 = vsyncpa [#allocation4], 0
    // Predicated region
    $region2: #{tpu_custom_call.1} parent=1 // pred_check
      _
    $region3: #{tpu_custom_call.1} parent=1 // pred_check_branch
      %12 = sbr.rel (0) target = $region5
    $region4: #{tpu_custom_call.1} parent=1 // pred_region
      %14 = vsyncadd [#allocation3], 0
      %s16 = sshll.u32 %s0, 4
      %s17 = int_to_ptr.hbm [resolvable:$true] %s16
      %s18 = sshll.u32 [#allocation2], 4
      %s19 = int_to_ptr.vmem [resolvable:$true] %s18
      %21 = dma.hbm_to_vmem [thread:$0]  %s17, 64, %s19, [#allocation3]
    $region5: #{tpu_custom_call.1} parent=1 // pred_fallthru
      _
    // Predicated region
    $region6: #{tpu_custom_call.1} parent=1 // pred_check
      _
    $region7: #{tpu_custom_call.1} parent=1 // pred_check_branch
      %23 = sbr.rel (0) target = $region9
    $region8: #{tpu_custom_call.1} parent=1 // pred_region
      %25 = vsyncadd [#allocation6], 0
      %s26 = sshll.u32 %s1, 4
      %s27 = int_to_ptr.hbm [resolvable:$true] %s26
      %s28 = sshll.u32 [#allocation5], 4
      %s29 = int_to_ptr.vmem [resolvable:$true] %s28
      %34 = dma.hbm_to_vmem [thread:$0]  %s27, 512, %s29, [#allocation6], 128, 128, 8
    $region9: #{tpu_custom_call.1} parent=1 // pred_fallthru
      _
    // Predicated region
    $region10: #{tpu_custom_call.1} parent=1 // pred_check
      _
    $region11: #{tpu_custom_call.1} parent=1 // pred_check_branch
      %36 = sbr.rel (0) target = $region13
    $region12: #{tpu_custom_call.1} parent=1 // pred_region
      _
    $region13: #{tpu_custom_call.1} parent=1 // pred_fallthru
      _
    // Predicated region
    $region14: #{tpu_custom_call.1} parent=1 // pred_check
      _
    $region15: #{tpu_custom_call.1} parent=1 // pred_check_branch
      %38 = sbr.rel (0) target = $region17
    $region16: #{tpu_custom_call.1} parent=1 // pred_region
      %40 = dma.done [#allocation3], 64
    $region17: #{tpu_custom_call.1} parent=1 // pred_fallthru
      _
    // Predicated region
    $region18: #{tpu_custom_call.1} parent=1 // pred_check
      _
    $region19: #{tpu_custom_call.1} parent=1 // pred_check_branch
      %42 = sbr.rel (0) target = $region21
    $region20: #{tpu_custom_call.1} parent=1 // pred_region
      %44 = dma.done [#allocation6], 512
    $region21: #{tpu_custom_call.1} parent=1 // pred_fallthru
      _
    %v45 = vld [vmem:[#allocation2] sm:$0xf]
    %v46 = vld [vmem:[#allocation5] sm:$0xff]
    %v47 = vld [vmem:[#allocation5 + $0x8] sm:$0xff]
    %v48 = vld [vmem:[#allocation5 + $0x10] sm:$0xff]
    %v49 = vld [vmem:[#allocation5 + $0x18] sm:$0xff]
    %v50 = vld [vmem:[%s2] sm:$0x1]
    %v52 = vperm.slane %v50, 0
    %vm54 = vcmask 261120
    %v56 = vsel %vm54, %v45, 0
    %58 = vmatpush.msra.mxu0 0.0
    %59 = vmatpush.msra.mxu0 0.0
    %60 = vmatpush.msra.mxu0 0.0
    %61 = vmatpush.msra.mxu0 0.0
    %62 = vmatpush.msra.mxu0 0.0
    %63 = vmatpush.msra.mxu0 0.0
    %64 = vmatpush.msra.mxu0 0.0
    %65 = vmatpush.msra.mxu0 0.0
    %66 = vmatpush.msra.mxu0 0.0
    %67 = vmatpush.msra.mxu0 0.0
    %68 = vmatpush.msra.mxu0 0.0
    %69 = vmatpush.msra.mxu0 0.0
    %70 = vmatpush.msra.mxu0 %v49
    %71 = vmatpush.msra.mxu0 %v48
    %72 = vmatpush.msra.mxu0 %v47
    %73 = vmatpush.msra.mxu0 %v46
    %74 = vmatmul.f32.gmra.mxu0 %v56
    %v75 = vpop.f32.mrf.mxu0
    %v76 = vadd.f32 %v52, %v75
    %77 = vdwg.mxu0
    %v78 = vlaneseq
    %v79 = vand.u32 %v78, 127
    %vm80 = vcmp.lt.s32.totalorder %v79, 0
    %v81 = vsub.s32 0, %v79
    %v82 = vsel %vm80, %v81, %v79
    %v83 = vshrl.u32 %v82, 5
    %v84 = vand.u32 %v82, 31
    %v85 = vsub.s32 0, %v84
    %v86 = vsel %vm80, %v85, %v84
    %vm87 = vcmp.ne.s32.totalorder %v86, 0
    %vm88 = vcmp.lt.s32.totalorder %v86, 0
    %vm89 = vmand %vm88, %vm87
    %v90 = vadd.s32 %v86, 32
    %v91 = vsel %vm89, %v90, %v86
    %vm92 = vcmp.lt.s32.totalorder %v91, 31
    %v93 = vand.u32 2147483647, %v76
    %vm94 = vcmp.le.f32.partialorder %v93, 0.7853982
    %vm95 = vcmp.lt.s32.totalorder %v76, 0
    %v96 = vand.u32 %v76, 2139095040
    %v97 = vshrl.u32 %v96, 23
    %v98 = vsub.s32 %v97, 127
    %v99 = vand.u32 2147483647, %v76
    %v100 = vand.u32 %v99, 8388607
    %v101 = vor.u32 %v100, 8388608
    %v102 = vsub.s32 0, %v101
    %v103 = vadd.s32 %v98, 1
    %vm104 = vcmp.gt.s32.totalorder %v103, 0
    %v105 = vsel %vm104, %v103, 0
    %v106 = vshrl.u32 %v105, 5
    %v107 = vand.u32 %v105, 31
    %v108 = vsub.s32 32, %v107
    %v109 = vshrl.u32 683565275, %v108
    %v110 = vshll.u32 683565275, %v107
    %v111 = vshrl.u32 2475754826, %v108
    %v112 = vor.u32 %v110, %v111
    %v113 = vshll.u32 2475754826, %v107
    %v114 = vshrl.u32 2131351028, %v108
    %v115 = vor.u32 %v113, %v114
    %v116 = vshll.u32 2131351028, %v107
    %v117 = vshrl.u32 2102212464, %v108
    %v118 = vor.u32 %v116, %v117
    %v119 = vshll.u32 2102212464, %v107
    %v120 = vshrl.u32 920167782, %v108
    %v121 = vor.u32 %v119, %v120
    %v122 = vshll.u32 920167782, %v107
    %v123 = vshrl.u32 1326507024, %v108
    %v124 = vor.u32 %v122, %v123
    %vm125 = vcmp.lt.s32.totalorder %v106, 1
    %vm126 = vcmp.lt.s32.totalorder %v106, 2
    %vm127 = vcmp.lt.s32.totalorder %v106, 3
    %vm128 = vcmp.lt.s32.totalorder %v106, 4
    %v129 = vsel %vm125, %v109, %v112
    %v130 = vsel %vm128, %v118, 2102212464
    %v131 = vsel %vm127, %v115, %v130
    %v132 = vsel %vm126, %v129, %v131
    %v133 = vsel %vm125, %v112, %v115
    %v134 = vsel %vm128, %v121, 920167782
    %v135 = vsel %vm127, %v118, %v134
    %v136 = vsel %vm126, %v133, %v135
    %v137 = vsel %vm125, %v115, %v118
    %v138 = vsel %vm128, %v124, 1326507024
    %v139 = vsel %vm127, %v121, %v138
    %v140 = vsel %vm126, %v137, %v139
    %v141 = vshll.u32 %v101, 8
    %v142 = vand.u32 %v141, 65535
    %v143 = vshrl.u32 %v141, 16
    %v144 = vand.u32 %v140, 65535
    %v145 = vshrl.u32 %v140, 16
    %v146 = vmul.u32 %v142, %v144
    %v147 = vmul.u32 %v142, %v145
    %v148 = vmul.u32 %v143, %v144
    %v149 = vmul.u32 %v143, %v145
    %v150 = vshll.u32 %v147, 16
    %v151 = vshrl.u32 %v147, 16
    %v152 = vshll.u32 %v148, 16
    %v153 = vshrl.u32 %v148, 16
    %vm154 = vc.u32 %v146, %v150
    %v155 = vsel %vm154, 1, 0
    %v156 = vadd.s32 %v146, %v150
    %v157 = vadd.s32 %v149, %v155
    %vm158 = vc.u32 %v156, %v152
    %v159 = vsel %vm158, 1, 0
    %v160 = vadd.s32 %v156, %v152
    %v161 = vadd.s32 %v157, %v159
    %v162 = vadd.s32 %v161, %v151
    %v163 = vadd.s32 %v162, %v153
    %v164 = vand.u32 %v141, 65535
    %v165 = vshrl.u32 %v141, 16
    %v166 = vand.u32 %v136, 65535
    %v167 = vshrl.u32 %v136, 16
    %v168 = vmul.u32 %v164, %v166
    %v169 = vmul.u32 %v164, %v167
    %v170 = vmul.u32 %v165, %v166
    %v171 = vmul.u32 %v165, %v167
    %v172 = vshll.u32 %v169, 16
    %v173 = vshrl.u32 %v169, 16
    %v174 = vshll.u32 %v170, 16
    %v175 = vshrl.u32 %v170, 16
    %vm176 = vc.u32 %v168, %v172
    %v177 = vsel %vm176, 1, 0
    %v178 = vadd.s32 %v168, %v172
    %v179 = vadd.s32 %v171, %v177
    %vm180 = vc.u32 %v178, %v174
    %v181 = vsel %vm180, 1, 0
    %v182 = vadd.s32 %v178, %v174
    %v183 = vadd.s32 %v179, %v181
    %v184 = vadd.s32 %v183, %v173
    %v185 = vadd.s32 %v184, %v175
    %v186 = vmul.u32 %v141, %v132
    %v187 = vadd.s32 %v163, %v182
    %vm188 = vc.u32 %v163, %v182
    %v189 = vadd.s32 %v185, 1
    %v190 = vsel %vm188, %v189, %v185
    %v191 = vadd.s32 %v186, %v190
    %v192 = vadd.s32 %v191, 536870912
    %v193 = vshrl.u32 %v192, 30
    %v194 = vshll.u32 %v193, 30
    %v195 = vsub.s32 %v191, %v194
    %vm196 = vcmp.lt.s32.totalorder %v195, 0
    %v197 = vsub.s32 0, %v195
    %v198 = vsel %vm196, %v197, %v195
    %v199 = vclz %v198
    %v200 = vsub.s32 %v199, 2
    %vm201 = vcmp.gt.s32.totalorder 0, %v200
    %v202 = vsel %vm201, 0, %v200
    %v203 = vsub.s32 32, %v202
    %v204 = vshll.u32 %v195, %v202
    %v205 = vshrl.u32 %v187, %v203
    %v206 = vor.u32 %v204, %v205
    %v207 = vsub.s32 4294967266, %v202
    %v208 = vadd.s32 %v207, 127
    %v209 = vshll.u32 %v208, 23
    %v210 = vor.u32 4788187, %v209
    %v211 = vand.u32 2147483647, %v210
    %v213 = vcvt.s32.f32 %v206
    %v214 = vmul.f32 %v213, %v211
    %v215 = vxor.u32 %v214, 2147483648
    %v216 = vsel %vm95, %v215, %v214
    %v217 = vsub.s32 4, %v193
    %v218 = vsel %vm95, %v217, %v193
    %v219 = vsel %vm94, %v76, %v216
    %v220 = vsel %vm94, 0, %v218
    %v221 = vmul.f32 %v219, %v219
    %v222 = vmul.f32 %v221, -0.001358992
    %v223 = vadd.f32 %v222, 0.041655596
    %v224 = vmul.f32 %v221, %v223
    %v225 = vadd.f32 %v224, -0.4999988
    %v226 = vmul.f32 %v221, %v225
    %v227 = vadd.f32 1.0, %v226
    %v228 = vmul.f32 %v219, %v219
    %v229 = vmul.f32 %v228, -0.00019511016
    %v230 = vadd.f32 %v229, 0.008332121
    %v231 = vmul.f32 %v228, %v230
    %v232 = vadd.f32 %v231, -0.16666654
    %v233 = vmul.f32 %v228, %v232
    %v234 = vadd.f32 %v233, 1.0
    %v235 = vmul.f32 %v234, %v219
    %vm236 = vweird.f32 %v76
    %v237 = vadd.s32 %v220, 3
    %v238 = vand.u32 %v237, 3
    %vm239 = vcmp.lt.s32.totalorder %v238, 2
    %vm240 = vcmp.eq.s32.totalorder %v238, 0
    %v241 = vxor.u32 %v235, 2147483648
    %v242 = vsel %vm240, %v227, %v241
    %vm243 = vcmp.eq.s32.totalorder %v238, 2
    %v244 = vxor.u32 %v227, 2147483648
    %v245 = vsel %vm243, %v244, %v235
    %v246 = vsel %vm239, %v242, %v245
    %v247 = vsel %vm236, nan, %v246
    %v248 = vsel %vm92, 1, 0
    %vm249 = vcmp.eq.s32.totalorder %v248, 1
    %v250 = vsel %vm249, %v247, %v76
    %251 = vst [vmem:[#allocation7] sm:$0xf] %v250
    // Predicated region
    $region22: #{tpu_custom_call.1} parent=1 // pred_check
      _
    $region23: #{tpu_custom_call.1} parent=1 // pred_check_branch
      %253 = sbr.rel (0) target = $region25
    $region24: #{tpu_custom_call.1} parent=1 // pred_region
      %255 = vsyncadd [#allocation4], 0
      %s257 = sshll.u32 [#allocation7], 4
      %s258 = int_to_ptr.vmem [resolvable:$true] %s257
      %s259 = sshll.u32 %s3, 4
      %s260 = int_to_ptr.hbm [resolvable:$true] %s259
      %262 = dma.vmem_to_hbm [thread:$0]  %s258, 64, %s260, [#allocation4]
    $region25: #{tpu_custom_call.1} parent=1 // pred_fallthru
      _
    // Predicated region
    $region26: #{tpu_custom_call.1} parent=1 // pred_check
      _
    $region27: #{tpu_custom_call.1} parent=1 // pred_check_branch
      %264 = sbr.rel (0) target = $region29
    $region28: #{tpu_custom_call.1} parent=1 // pred_region
      %266 = dma.done [#allocation4], 64
    $region29: #{tpu_custom_call.1} parent=1 // pred_fallthru
      _
    %267 = vsyncpa [#allocation3], 1
    %268 = vsyncpa [#allocation6], 1
    %269 = vsyncpa [#allocation4], 1

</llo_original>
